<compile_context>
chip_gen: v7x
topology: tpu7x:2x2x1
jax: 0.10.0
libtpu: 0.0.40
codegen_flags: <defaults>
</compile_context>

<pallas_src>
import functools

import jax
import jax.numpy as jnp
from jax import lax
from jax.experimental import pallas as pl
from jax.experimental.pallas import tpu as pltpu

CONV_LEN = 3
CONV_NUM = 32
BN_EPS = 1e-5


def _ind_conv_block_kernel(xp_ref, w_ref, scale_ref, shift_ref, o_ref, *,
                           TB, H, W, C):
    """One grid step = TB batch elements.

    xp_ref   : (TB, H+2, W+2)        zero-padded single-channel input images
    w_ref    : (3, W+2, W*C)         banded conv weight (one band per kernel row)
    scale_ref: (1, (W//2)*C)         folded BN scale, tiled over pooled columns
    shift_ref: (1, (W//2)*C)         folded BN shift (+ conv bias), tiled
    o_ref    : (TB, H//2, (W//2)*C)  lane-dense output slab
    """
    Wp = W + 2
    Hh = H // 2
    half = (W // 2) * C

    xp = xp_ref[...]                                        # (TB, H+2, W+2)

    # Conv1 as 3 accumulated banded matmuls (one per kernel row kh):
    #   rows = flattened (batch, h) pixels
    #   cols = (pool-pair p, pooled column wh, out channel c)
    conv = None
    for kh in range(3):
        slab = xp[:, kh:kh + H, :].reshape(TB * H, Wp)      # (TB*H, W+2)
        part = jnp.dot(slab, w_ref[kh],
                       preferred_element_type=jnp.float32)  # (TB*H, W*C)
        conv = part if conv is None else conv + part

    # MaxPool2d(2, 2):
    #  - W direction: even-w / odd-w results already live in separate
    #    128-aligned lane halves (by the weight column order) -> free slice.
    #  - H direction: pairwise maximum of adjacent rows.
    wpool = jnp.maximum(conv[:, :half], conv[:, half:])     # (TB*H, half)
    wp4 = wpool.reshape(TB, Hh, 2, half)
    pooled = jnp.maximum(wp4[:, :, 0, :], wp4[:, :, 1, :])  # (TB, Hh, half)

    # BatchNorm (eval, conv bias folded into shift) + ReLU.  Dropout = identity.
    y = (pooled * scale_ref[...].reshape(1, 1, half)
         + shift_ref[...].reshape(1, 1, half))
    o_ref[...] = jnp.maximum(y, 0.0).astype(o_ref.dtype)


def ind_conv_block(x_nchw, w_conv, b_conv, gamma, beta, run_mean, run_var,
                   *, tb_max=32):
    """x_nchw: (N, 1, H, W) float32.  Returns (N, CONV_NUM, H//2, W//2)."""
    N, Cin, H, W = x_nchw.shape
    assert Cin == 1 and H % 2 == 0 and W % 2 == 0
    C = CONV_NUM
    Hh, Wh = H // 2, W // 2
    half = Wh * C

    # ---- grid / batch-tile choice ------------------------------------------
    # Batch TB images per grid step to amortize per-step pipeline overhead,
    # but keep >= 2 steps whenever N >= 2 so both v7x TensorCores get work.
    # Per-step VMEM at tb_max=32, H=W=16 is < 2 MiB, safe on v5e/v6e/v7x
    # without raising vmem_limit_bytes.
    num_steps = max(1, -(-N // tb_max))
    if N >= 2:
        num_steps = max(num_steps, 2)
    TB = -(-N // num_steps)
    Np = num_steps * TB                                     # padded batch

    # ---- wrapper-side glue (plain JAX, one-time) ---------------------------
    # Zero-pad spatially for the 3x3 "same" conv; pad batch up to Np.
    x_pad = jnp.pad(x_nchw[:, 0, :, :], ((0, Np - N), (1, 1), (1, 1)))

    # Fold conv bias into the BN shift (per-channel constant add commutes with
    # max-pool).  Do NOT fold BN scale into the conv weights.
    scale = gamma / jnp.sqrt(run_var + BN_EPS)              # (C,)
    shift = beta + (b_conv - run_mean) * scale              # (C,)
    scale_lane = jnp.tile(scale, Wh).reshape(1, half)       # lane = wh*C + c
    shift_lane = jnp.tile(shift, Wh).reshape(1, half)

    # Banded (block-Toeplitz) conv weight, one band per kernel row kh:
    #   band[kh, j, col] = w_conv[c, 0, kh, j - w]  if 0 <= j - w < 3 else 0
    # with w = 2*wh + p and col = p*(Wh*C) + wh*C + c, so the matmul output
    # lanes already separate the 2x2-pool W pairs into aligned halves.
    j_idx = jnp.arange(W + 2)[:, None]                      # (W+2, 1)
    w_idx = jnp.arange(W)[None, :]                          # (1, W)
    kw = j_idx - w_idx                                      # (W+2, W)
    valid = (kw >= 0) & (kw < 3)
    kw_c = jnp.clip(kw, 0, 2)
    wk = jnp.transpose(w_conv[:, 0, :, :], (1, 2, 0))       # (3, 3, C) [kh,kw,c]
    band = wk[:, kw_c, :]                                   # (3, W+2, W, C)
    band = jnp.where(valid[None, :, :, None], band, 0.0)
    band = band.reshape(3, W + 2, Wh, 2, C)                 # w -> (wh, p)
    band = jnp.transpose(band, (0, 1, 3, 2, 4)).reshape(3, W + 2, W * C)

    kernel = functools.partial(_ind_conv_block_kernel, TB=TB, H=H, W=W, C=C)

    out_lane = pl.pallas_call(
        kernel,
        out_shape=jax.ShapeDtypeStruct((Np, Hh, half), jnp.float32),
        grid_spec=pltpu.PrefetchScalarGridSpec(
            num_scalar_prefetch=0,
            grid=(num_steps,),
            in_specs=[
                pl.BlockSpec((TB, H + 2, W + 2), lambda n: (n, 0, 0)),
                pl.BlockSpec((3, W + 2, W * C), lambda n: (0, 0, 0)),
                pl.BlockSpec((1, half), lambda n: (0, 0)),
                pl.BlockSpec((1, half), lambda n: (0, 0)),
            ],
            out_specs=pl.BlockSpec((TB, Hh, half), lambda n: (n, 0, 0)),
        ),
        compiler_params=pltpu.CompilerParams(
            dimension_semantics=("parallel",)),
    )(x_pad, band, scale_lane, shift_lane)

    # Un-fuse the lane-dense slab back to NHWC and drop batch padding.
    out_nhwc = out_lane[:N].reshape(N, Hh, Wh, C)
    # TODO(synk): a fused downstream consumer could take NHWC (or the raw
    # lane-dense slab) directly and skip this full extra HBM read+write.
    return jnp.transpose(out_nhwc, (0, 3, 1, 2))


def _reference(x_nchw, w_conv, b_conv, gamma, beta, run_mean, run_var):
    """Pure-JAX NCHW reference matching the PyTorch forward (eval mode)."""
    conv = lax.conv_general_dilated(
        x_nchw, w_conv, window_strides=(1, 1), padding=((1, 1), (1, 1)),
        dimension_numbers=("NCHW", "OIHW", "NCHW"))
    conv = conv + b_conv.reshape(1, -1, 1, 1)
    pooled = lax.reduce_window(conv, -jnp.inf, lax.max,
                               (1, 1, 2, 2), (1, 1, 2, 2), "VALID")
    scale = gamma / jnp.sqrt(run_var + BN_EPS)
    shift = beta - run_mean * scale
    y = pooled * scale.reshape(1, -1, 1, 1) + shift.reshape(1, -1, 1, 1)
    return jnp.maximum(y, 0.0)


if __name__ == "__main__":
    key = jax.random.PRNGKey(0)
    k_x, k_w, k_b, k_g, k_be, k_m, k_v = jax.random.split(key, 7)

    # Small shapes consistent with the module: N=2, C_in=1, H=W=16.
    N, H, W = 2, 16, 16
    x = jax.random.normal(k_x, (N, 1, H, W), dtype=jnp.float32)

    # Deterministic parameters (shapes from nn.Conv2d / nn.BatchNorm2d).
    w_conv = jax.random.normal(k_w, (CONV_NUM, 1, 3, CONV_LEN), jnp.float32) * 0.1
    b_conv = jax.random.normal(k_b, (CONV_NUM,), jnp.float32) * 0.1
    gamma = 1.0 + 0.1 * jax.random.normal(k_g, (CONV_NUM,), jnp.float32)
    beta = 0.1 * jax.random.normal(k_be, (CONV_NUM,), jnp.float32)
    run_mean = 0.1 * jax.random.normal(k_m, (CONV_NUM,), jnp.float32)
    run_var = 1.0 + 0.1 * jax.random.uniform(k_v, (CONV_NUM,), jnp.float32)

    out = ind_conv_block(x, w_conv, b_conv, gamma, beta, run_mean, run_var)
    out = jax.block_until_ready(out)
    ref = _reference(x, w_conv, b_conv, gamma, beta, run_mean, run_var)
    assert out.shape == (N, CONV_NUM, H // 2, W // 2), out.shape
    assert jnp.allclose(out, ref, atol=1e-4, rtol=1e-4), float(
        jnp.max(jnp.abs(out - ref)))

    # Also exercise the batched (TB > 1) + padded-batch path.
    N2 = 5
    x2 = jax.random.normal(jax.random.PRNGKey(1), (N2, 1, H, W), jnp.float32)
    out2 = jax.block_until_ready(
        ind_conv_block(x2, w_conv, b_conv, gamma, beta, run_mean, run_var))
    ref2 = _reference(x2, w_conv, b_conv, gamma, beta, run_mean, run_var)
    assert out2.shape == (N2, CONV_NUM, H // 2, W // 2), out2.shape
    assert jnp.allclose(out2, ref2, atol=1e-4, rtol=1e-4), float(
        jnp.max(jnp.abs(out2 - ref2)))

    print("KERNEL_OK")
</pallas_src>

<mosaic_0001>
module attributes {stable_mosaic.version = 11 : i64} {
  func.func @_ind_conv_block_kernel(%arg0: i32, %arg1: memref<1x18x18xf32, #tpu.memory_space<vmem>>, %arg2: memref<3x18x512xf32, #tpu.memory_space<vmem>>, %arg3: memref<1x256xf32, #tpu.memory_space<vmem>>, %arg4: memref<1x256xf32, #tpu.memory_space<vmem>>, %arg5: memref<1x8x256xf32, #tpu.memory_space<vmem>>) attributes {dimension_semantics = [#tpu.dimension_semantics<parallel>], iteration_bounds = array<i64: 2>, scalar_prefetch = 0 : i64, scratch_operands = 0 : i64, tpu.core_type = #tpu.core_type<tc>, window_params = [{transform_indices = @transform_0, window_bounds = array<i64: 1, 18, 18>}, {pipeline_mode = #tpu.pipeline_mode<synchronous>, transform_indices = @transform_1, window_bounds = array<i64: 3, 18, 512>}, {pipeline_mode = #tpu.pipeline_mode<synchronous>, transform_indices = @transform_2, window_bounds = array<i64: 1, 256>}, {pipeline_mode = #tpu.pipeline_mode<synchronous>, transform_indices = @transform_3, window_bounds = array<i64: 1, 256>}, {transform_indices = @transform_4, window_bounds = array<i64: 1, 8, 256>}]} {
    %c0 = arith.constant 0 : index
    %c0_0 = arith.constant 0 : index
    %c0_1 = arith.constant 0 : index
    %0 = vector.load %arg1[%c0, %c0_0, %c0_1] : memref<1x18x18xf32, #tpu.memory_space<vmem>>, vector<1x18x18xf32>
    %1 = vector.extract_strided_slice %0 {offsets = [0, 0, 0], sizes = [1, 16, 18], strides = [1, 1, 1]} : vector<1x18x18xf32> to vector<1x16x18xf32>
    %2 = vector.shape_cast %1 : vector<1x16x18xf32> to vector<16x18xf32>
    %c0_2 = arith.constant 0 : index
    %c0_3 = arith.constant 0 : index
    %c0_4 = arith.constant 0 : index
    %3 = vector.load %arg2[%c0_2, %c0_3, %c0_4] : memref<3x18x512xf32, #tpu.memory_space<vmem>>, vector<1x18x512xf32>
    %4 = vector.shape_cast %3 : vector<1x18x512xf32> to vector<18x512xf32>
    %cst = arith.constant dense<0.000000e+00> : vector<16x512xf32>
    %5 = tpu.matmul %2, %4, %cst {dimension_numbers = #tpu.dot_dimension_numbers<[1], [0], [0], [1], [0, 0, 1, 1], [], []>} : vector<16x18xf32>, vector<18x512xf32>, vector<16x512xf32> -> vector<16x512xf32>
    %6 = vector.extract_strided_slice %0 {offsets = [0, 1, 0], sizes = [1, 16, 18], strides = [1, 1, 1]} : vector<1x18x18xf32> to vector<1x16x18xf32>
    %7 = vector.shape_cast %6 : vector<1x16x18xf32> to vector<16x18xf32>
    %c1 = arith.constant 1 : index
    %c0_5 = arith.constant 0 : index
    %c0_6 = arith.constant 0 : index
    %8 = vector.load %arg2[%c1, %c0_5, %c0_6] : memref<3x18x512xf32, #tpu.memory_space<vmem>>, vector<1x18x512xf32>
    %9 = vector.shape_cast %8 : vector<1x18x512xf32> to vector<18x512xf32>
    %cst_7 = arith.constant dense<0.000000e+00> : vector<16x512xf32>
    %10 = tpu.matmul %7, %9, %cst_7 {dimension_numbers = #tpu.dot_dimension_numbers<[1], [0], [0], [1], [0, 0, 1, 1], [], []>} : vector<16x18xf32>, vector<18x512xf32>, vector<16x512xf32> -> vector<16x512xf32>
    %11 = arith.addf %5, %10 : vector<16x512xf32>
    %12 = vector.extract_strided_slice %0 {offsets = [0, 2, 0], sizes = [1, 16, 18], strides = [1, 1, 1]} : vector<1x18x18xf32> to vector<1x16x18xf32>
    %13 = vector.shape_cast %12 : vector<1x16x18xf32> to vector<16x18xf32>
    %c2 = arith.constant 2 : index
    %c0_8 = arith.constant 0 : index
    %c0_9 = arith.constant 0 : index
    %14 = vector.load %arg2[%c2, %c0_8, %c0_9] : memref<3x18x512xf32, #tpu.memory_space<vmem>>, vector<1x18x512xf32>
    %15 = vector.shape_cast %14 : vector<1x18x512xf32> to vector<18x512xf32>
    %cst_10 = arith.constant dense<0.000000e+00> : vector<16x512xf32>
    %16 = tpu.matmul %13, %15, %cst_10 {dimension_numbers = #tpu.dot_dimension_numbers<[1], [0], [0], [1], [0, 0, 1, 1], [], []>} : vector<16x18xf32>, vector<18x512xf32>, vector<16x512xf32> -> vector<16x512xf32>
    %17 = arith.addf %11, %16 : vector<16x512xf32>
    %18 = vector.extract_strided_slice %17 {offsets = [0, 0], sizes = [16, 256], strides = [1, 1]} : vector<16x512xf32> to vector<16x256xf32>
    %19 = vector.extract_strided_slice %17 {offsets = [0, 256], sizes = [16, 256], strides = [1, 1]} : vector<16x512xf32> to vector<16x256xf32>
    %20 = arith.maximumf %18, %19 : vector<16x256xf32>
    %21 = vector.shape_cast %20 : vector<16x256xf32> to vector<1x8x2x256xf32>
    %22 = vector.extract_strided_slice %21 {offsets = [0, 0, 0, 0], sizes = [1, 8, 1, 256], strides = [1, 1, 1, 1]} : vector<1x8x2x256xf32> to vector<1x8x1x256xf32>
    %23 = vector.shape_cast %22 : vector<1x8x1x256xf32> to vector<1x8x256xf32>
    %24 = vector.extract_strided_slice %21 {offsets = [0, 0, 1, 0], sizes = [1, 8, 1, 256], strides = [1, 1, 1, 1]} : vector<1x8x2x256xf32> to vector<1x8x1x256xf32>
    %25 = vector.shape_cast %24 : vector<1x8x1x256xf32> to vector<1x8x256xf32>
    %26 = arith.maximumf %23, %25 : vector<1x8x256xf32>
    %c0_11 = arith.constant 0 : index
    %c0_12 = arith.constant 0 : index
    %27 = vector.load %arg3[%c0_11, %c0_12] : memref<1x256xf32, #tpu.memory_space<vmem>>, vector<1x256xf32>
    %28 = vector.shape_cast %27 : vector<1x256xf32> to vector<1x1x256xf32>
    %29 = vector.broadcast %28 : vector<1x1x256xf32> to vector<1x8x256xf32>
    %30 = arith.mulf %26, %29 : vector<1x8x256xf32>
    %c0_13 = arith.constant 0 : index
    %c0_14 = arith.constant 0 : index
    %31 = vector.load %arg4[%c0_13, %c0_14] : memref<1x256xf32, #tpu.memory_space<vmem>>, vector<1x256xf32>
    %32 = vector.shape_cast %31 : vector<1x256xf32> to vector<1x1x256xf32>
    %33 = vector.broadcast %32 : vector<1x1x256xf32> to vector<1x8x256xf32>
    %34 = arith.addf %30, %33 : vector<1x8x256xf32>
    %cst_15 = arith.constant 0.000000e+00 : f32
    %35 = vector.broadcast %cst_15 : f32 to vector<1x8x256xf32>
    %36 = arith.maximumf %34, %35 : vector<1x8x256xf32>
    %c0_16 = arith.constant 0 : index
    %c0_17 = arith.constant 0 : index
    %c0_18 = arith.constant 0 : index
    %37 = vector.load %arg5[%c0_16, %c0_17, %c0_18] : memref<1x8x256xf32, #tpu.memory_space<vmem>>, vector<1x8x256xf32>
    tpu.vector_store %arg5[%c0_16, %c0_17, %c0_18], %36 {strides = array<i32>} : memref<1x8x256xf32, #tpu.memory_space<vmem>>, vector<1x8x256xf32>,
    return
  }
  func.func @transform_0(%arg0: i32) -> (i32, i32, i32) {
    %c0_i32 = arith.constant 0 : i32
    %c0_i32_0 = arith.constant 0 : i32
    %c0_i32_1 = arith.constant 0 : i32
    return %arg0, %c0_i32, %c0_i32_0 : i32, i32, i32
  }
  func.func @transform_1(%arg0: i32) -> (i32, i32, i32) {
    %c0_i32 = arith.constant 0 : i32
    %c0_i32_0 = arith.constant 0 : i32
    %c0_i32_1 = arith.constant 0 : i32
    %c0_i32_2 = arith.constant 0 : i32
    return %c0_i32, %c0_i32_0, %c0_i32_1 : i32, i32, i32
  }
  func.func @transform_2(%arg0: i32) -> (i32, i32) {
    %c0_i32 = arith.constant 0 : i32
    %c0_i32_0 = arith.constant 0 : i32
    %c0_i32_1 = arith.constant 0 : i32
    return %c0_i32, %c0_i32_0 : i32, i32
  }
  func.func @transform_3(%arg0: i32) -> (i32, i32) {
    %c0_i32 = arith.constant 0 : i32
    %c0_i32_0 = arith.constant 0 : i32
    %c0_i32_1 = arith.constant 0 : i32
    return %c0_i32, %c0_i32_0 : i32, i32
  }
  func.func @transform_4(%arg0: i32) -> (i32, i32, i32) {
    %c0_i32 = arith.constant 0 : i32
    %c0_i32_0 = arith.constant 0 : i32
    %c0_i32_1 = arith.constant 0 : i32
    return %arg0, %c0_i32, %c0_i32_0 : i32, i32, i32
  }
}

</mosaic_0001>

<llo_original>
// kernel: tpu_custom_call.1
$region0: #{tpu_custom_call.1}
  #allocation0 [shape = 'u32[]', space=smem, size = 0x4, offset = 0x4, fixed_abs, tag = 'smem constant byte address 0x4 - core index']
  #allocation1 [shape = 'u32[144,128]{1,0:T(1,128)}', space=vmem, size = 0x12000, scoped, tag = 'internal scratch']
  %s0 = inlined_call_operand.vmem [shape: f32[2,18,18], index: 0, kind: input, shape index: {}]
  %s1 = inlined_call_operand.hbm [shape: f32[3,18,512], index: 1, kind: input, shape index: {}]
  %s2 = inlined_call_operand.vmem [shape: f32[1,256], index: 2, kind: input, shape index: {}]
  %s3 = inlined_call_operand.vmem [shape: f32[1,256], index: 3, kind: input, shape index: {}]
  %s4 = inlined_call_operand.hbm [shape: f32[2,8,256], index: 4, kind: output, shape index: {}]
  %s5 = sld [smem:[#allocation0]]
  $region53: #{tpu_custom_call.1} parent=0
    _
  %s7 = ssub.s32 1, %s5
  %s8 = scalar_select 0, %s7, %s5
  $region1: #{tpu_custom_call.1} parent=0
    #allocation2 [shape = 'u8[147456]{0}', space=vmem, size = 0x24000, scoped, tag = 'input window, operand 1, single buffered']
    #allocation3 [shape = 's32[2]{0}', space=sflag, size = 0x8, scoped, tag = 'scoped memory for tpu_custom_call.1']
    #allocation4 [shape = 's32[2]{0}', space=sflag, size = 0x8, scoped, tag = 'scoped memory for tpu_custom_call.1']
    #allocation5 [shape = 'u8[16384]{0}', space=vmem, size = 0x4000, scoped, tag = 'output window, operand 0']
    %9 = vsyncpa [#allocation3], 0
    %10 = vsyncpa [#allocation4], 0
    %s11 = scalar_lea.sflag [#allocation4], 1
    %12 = vsyncpa %s11, 0
    loop: start=0, step=1, limit=4
    $region2: #{tpu_custom_call.1} parent=1 // loop_pre_header
      _
    $region3: #{tpu_custom_call.1} parent=1 // loop_header
      %s14 = sphi 0, %s18
      %p15 = scmp.ge.s32.totalorder %s14, 4
      %s24 = sphi 0, %s26
      %s27 = sphi 0, %s24
      %s28 = sphi 0, %s27
      %s44 = sphi 0, %s28
      %s48 = sphi 0, %s48
      %s50 = sphi 0, %s48
      %s51 = sphi 0, %s50
      %s65 = sphi 0, %s51
      %s69 = sphi 0, %s69
      %s71 = sphi 0, %s69
      %s72 = sphi 0, %s71
      %s86 = sphi 0, %s72
      %s90 = sphi 0, %s90
      %s92 = sphi 0, %s90
      %s93 = sphi 0, %s92
      %s107 = sphi 0, %s93
      %s113 = sphi 0, %s115
      %s116 = sphi 0, %s113
      %s117 = sphi 0, %s116
      %s133 = sphi 0, %s117
    $region4: #{tpu_custom_call.1} parent=1 // loop_header_branch
      %17 = sbr.rel (%p15) target = $region8
    $region5: #{tpu_custom_call.1} parent=1 // loop_body
      %s19 = ssub.s32 %s14, 1
      %s20 = ssub.s32 %s14, 2
      %s21 = sadd.s32 %s14, 1
      %s22 = ssub.s32 %s14, %s21
      %p23 = scmp.eq.s32.totalorder %s22, 0
      %s25 = sadd.s32 %s24, 1
      %s26 = scalar_select %p23, %s24, %s25
      %p29 = pneg %p23
      %p30 = scmp.eq.s32.totalorder %s14, 1
      %p31 = por %p29, %p30
      %p32 = scmp.ne.s32.totalorder %s24, %s27
      %p33 = scmp.eq.s32.totalorder %s14, 0
      %p34 = por %p32, %p33
      %p35 = scmp.ne.s32.totalorder %s24, %s27
      %p36 = scmp.eq.s32.totalorder %s19, 1
      %p37 = por %p35, %p36
      %p38 = scmp.ne.s32.totalorder %s27, %s28
      %p39 = scmp.eq.s32.totalorder %s19, 0
      %p40 = por %p38, %p39
      %p41 = scmp.ne.s32.totalorder %s27, %s28
      %p42 = scmp.eq.s32.totalorder %s20, 1
      %p43 = por %p41, %p42
      %p45 = scmp.ne.s32.totalorder %s28, %s44
      %p46 = scmp.eq.s32.totalorder %s20, 0
      %p47 = por %p45, %p46
      %s49 = sadd.s32 %s48, 1
      %p52 = scmp.eq.s32.totalorder %s14, 1
      %p53 = scmp.ne.s32.totalorder %s48, %s50
      %p54 = scmp.eq.s32.totalorder %s14, 0
      %p55 = por %p53, %p54
      %p56 = scmp.ne.s32.totalorder %s48, %s50
      %p57 = scmp.eq.s32.totalorder %s19, 1
      %p58 = por %p56, %p57
      %p59 = scmp.ne.s32.totalorder %s50, %s51
      %p60 = scmp.eq.s32.totalorder %s19, 0
      %p61 = por %p59, %p60
      %p62 = scmp.ne.s32.totalorder %s50, %s51
      %p63 = scmp.eq.s32.totalorder %s20, 1
      %p64 = por %p62, %p63
      %p66 = scmp.ne.s32.totalorder %s51, %s65
      %p67 = scmp.eq.s32.totalorder %s20, 0
      %p68 = por %p66, %p67
      %s70 = sadd.s32 %s69, 1
      %p73 = scmp.eq.s32.totalorder %s14, 1
      %p74 = scmp.ne.s32.totalorder %s69, %s71
      %p75 = scmp.eq.s32.totalorder %s14, 0
      %p76 = por %p74, %p75
      %p77 = scmp.ne.s32.totalorder %s69, %s71
      %p78 = scmp.eq.s32.totalorder %s19, 1
      %p79 = por %p77, %p78
      %p80 = scmp.ne.s32.totalorder %s71, %s72
      %p81 = scmp.eq.s32.totalorder %s19, 0
      %p82 = por %p80, %p81
      %p83 = scmp.ne.s32.totalorder %s71, %s72
      %p84 = scmp.eq.s32.totalorder %s20, 1
      %p85 = por %p83, %p84
      %p87 = scmp.ne.s32.totalorder %s72, %s86
      %p88 = scmp.eq.s32.totalorder %s20, 0
      %p89 = por %p87, %p88
      %s91 = sadd.s32 %s90, 1
      %p94 = scmp.eq.s32.totalorder %s14, 1
      %p95 = scmp.ne.s32.totalorder %s90, %s92
      %p96 = scmp.eq.s32.totalorder %s14, 0
      %p97 = por %p95, %p96
      %p98 = scmp.ne.s32.totalorder %s90, %s92
      %p99 = scmp.eq.s32.totalorder %s19, 1
      %p100 = por %p98, %p99
      %p101 = scmp.ne.s32.totalorder %s92, %s93
      %p102 = scmp.eq.s32.totalorder %s19, 0
      %p103 = por %p101, %p102
      %p104 = scmp.ne.s32.totalorder %s92, %s93
      %p105 = scmp.eq.s32.totalorder %s20, 1
      %p106 = por %p104, %p105
      %p108 = scmp.ne.s32.totalorder %s93, %s107
      %p109 = scmp.eq.s32.totalorder %s20, 0
      %p110 = por %p108, %p109
      %s111 = ssub.s32 %s14, %s21
      %p112 = scmp.eq.s32.totalorder %s111, 0
      %s114 = sadd.s32 %s113, 1
      %s115 = scalar_select %p112, %s113, %s114
      %p118 = pneg %p112
      %p119 = scmp.eq.s32.totalorder %s14, 1
      %p120 = por %p118, %p119
      %p121 = scmp.ne.s32.totalorder %s113, %s116
      %p122 = scmp.eq.s32.totalorder %s14, 0
      %p123 = por %p121, %p122
      %p124 = scmp.ne.s32.totalorder %s113, %s116
      %p125 = scmp.eq.s32.totalorder %s19, 1
      %p126 = por %p124, %p125
      %p127 = scmp.ne.s32.totalorder %s116, %s117
      %p128 = scmp.eq.s32.totalorder %s19, 0
      %p129 = por %p127, %p128
      %p130 = scmp.ne.s32.totalorder %s116, %s117
      %p131 = scmp.eq.s32.totalorder %s20, 1
      %p132 = por %p130, %p131
      %p134 = scmp.ne.s32.totalorder %s117, %s133
      %p135 = scmp.eq.s32.totalorder %s20, 0
      %p136 = por %p134, %p135
      %p137 = scmp.le.s32.totalorder 1, %s14
      %p138 = scmp.lt.s32.totalorder %s14, 3
      %p139 = pnand %p137, %p138
      %p140 = pneg %p139
      // Predicated region
      $region9: #{tpu_custom_call.1} parent=5 // pred_check
        _
      $region10: #{tpu_custom_call.1} parent=5 // pred_check_branch
        %142 = sbr.rel (%p139) target = $region12
      $region11: #{tpu_custom_call.1} parent=5 // pred_region
        %s143 = ssub.s32 %s14, 1
        // Predicated region
        $region13: #{tpu_custom_call.1} parent=11 // pred_check
          %p144 = pneg %p61
        $region14: #{tpu_custom_call.1} parent=11 // pred_check_branch
          %146 = sbr.rel (%p144) target = $region16
        $region15: #{tpu_custom_call.1} parent=11 // pred_region
          %s148 = ssub.s32 4608, 4608
          %149 = vsyncadd [#allocation3], %s148
          %s150 = sshll.u32 [#allocation2], 4
          %s151 = int_to_ptr.vmem [resolvable:$true] %s150
          %156 = dma.hbm_to_vmem [thread:$0]  %s1, 4608, %s151, [#allocation3], 512, 512, 32
        $region16: #{tpu_custom_call.1} parent=11 // pred_fallthru
          _
        // Predicated region
        $region17: #{tpu_custom_call.1} parent=11 // pred_check
          %p157 = pneg %p82
        $region18: #{tpu_custom_call.1} parent=11 // pred_check_branch
          %159 = sbr.rel (%p157) target = $region20
        $region19: #{tpu_custom_call.1} parent=11 // pred_region
          _
        $region20: #{tpu_custom_call.1} parent=11 // pred_fallthru
          _
        // Predicated region
        $region21: #{tpu_custom_call.1} parent=11 // pred_check
          %p160 = pneg %p103
        $region22: #{tpu_custom_call.1} parent=11 // pred_check_branch
          %162 = sbr.rel (%p160) target = $region24
        $region23: #{tpu_custom_call.1} parent=11 // pred_region
          _
        $region24: #{tpu_custom_call.1} parent=11 // pred_fallthru
          _
      $region12: #{tpu_custom_call.1} parent=5 // pred_fallthru
        _
      %p163 = scmp.lt.s32.totalorder %s14, 2
      // Predicated region
      $region25: #{tpu_custom_call.1} parent=5 // pred_check
        %p164 = pneg %p163
      $region26: #{tpu_custom_call.1} parent=5 // pred_check_branch
        %166 = sbr.rel (%p164) target = $region28
      $region27: #{tpu_custom_call.1} parent=5 // pred_region
        // Predicated region
        $region29: #{tpu_custom_call.1} parent=27 // pred_check
          %p167 = pneg %p34
        $region30: #{tpu_custom_call.1} parent=27 // pred_check_branch
          %169 = sbr.rel (%p167) target = $region32
        $region31: #{tpu_custom_call.1} parent=27 // pred_region
          %p170 = scmp.lt.s32.totalorder %s14, 1
          %s171 = scalar_select %p170, %s14, 1
          %s172 = smul.addr %s171, 3
          %s173 = smul.addr %s172, 8
          %s174 = scalar_lea.vmem %s0, %s173
        $region32: #{tpu_custom_call.1} parent=27 // pred_fallthru
          _
      $region28: #{tpu_custom_call.1} parent=5 // pred_fallthru
        _
      %p175 = scmp.le.s32.totalorder 1, %s14
      %p176 = scmp.lt.s32.totalorder %s14, 3
      %p177 = pnand %p175, %p176
      %p178 = pneg %p177
      // Predicated region
      $region33: #{tpu_custom_call.1} parent=5 // pred_check
        _
      $region34: #{tpu_custom_call.1} parent=5 // pred_check_branch
        %180 = sbr.rel (%p177) target = $region36
      $region35: #{tpu_custom_call.1} parent=5 // pred_region
        %s181 = ssub.s32 %s14, 1
        // Predicated region
        $region37: #{tpu_custom_call.1} parent=35 // pred_check
          %p182 = pneg %p61
        $region38: #{tpu_custom_call.1} parent=35 // pred_check_branch
          %184 = sbr.rel (%p182) target = $region40
        $region39: #{tpu_custom_call.1} parent=35 // pred_region
          %185 = dma.done [#allocation3], 4608
        $region40: #{tpu_custom_call.1} parent=35 // pred_fallthru
          _
        %p186 = scmp.lt.s32.totalorder %s19, 1
        %s187 = scalar_select %p186, %s19, 1
        %s188 = smul.addr %s187, 3
        %s189 = smul.addr %s188, 8
        %s190 = scalar_lea.vmem %s0, %s189
        %p191 = pneg %p40
        %p192 = pneg %p37
        %p193 = pneg %p61
        %p194 = pneg %p58
        %p195 = pneg %p82
        %p196 = pneg %p79
        %p197 = pneg %p103
        %p198 = pneg %p100
        %p199 = pneg %p129
        %p200 = pneg %p126
        %s201 = sand.u32 %s116, 1
        %s202 = scalar_lea.sflag [#allocation4], %s201
        %s203 = sand.u32 %s116, 1
        %s204 = smul.addr %s203, 16
        %s205 = scalar_lea.vmem [#allocation5], %s204
        %p206 = scmp.lt.s32.totalorder %s19, 1
        %s207 = scalar_select %p206, %s19, 1
        %s208 = smul.addr %s207, 3
        %s209 = smul.addr %s208, 8
        %s210 = scalar_lea.vmem %s0, %s209
        %v211 = vld [vmem:[%s210] sm:$0xff]
        %v212 = vld [vmem:[%s210 + $0x8] sm:$0xff]
        %v213 = vld [vmem:[%s210 + $0x10] sm:$0x3]
        %v214 = vld [vmem:[#allocation2] sm:$0xff]
        %v215 = vld [vmem:[#allocation2 + $0x8] sm:$0xff]
        %v216 = vld [vmem:[#allocation2 + $0x10] sm:$0xff]
        %v217 = vld [vmem:[#allocation2 + $0x18] sm:$0xff]
        %v218 = vld [vmem:[#allocation2 + $0x20] sm:$0xff]
        %v219 = vld [vmem:[#allocation2 + $0x28] sm:$0xff]
        %v220 = vld [vmem:[#allocation2 + $0x30] sm:$0xff]
        %v221 = vld [vmem:[#allocation2 + $0x38] sm:$0xff]
        %v222 = vld [vmem:[#allocation2 + $0x40] sm:$0x3]
        %v223 = vld [vmem:[#allocation2 + $0x48] sm:$0x3]
        %v224 = vld [vmem:[#allocation2 + $0x50] sm:$0x3]
        %v225 = vld [vmem:[#allocation2 + $0x58] sm:$0x3]
        %s226 = scalar_lea.vmem [#allocation2], 96
        %v227 = vld [vmem:[%s226] sm:$0xff]
        %v228 = vld [vmem:[%s226 + $0x8] sm:$0xff]
        %v229 = vld [vmem:[%s226 + $0x10] sm:$0xff]
        %v230 = vld [vmem:[%s226 + $0x18] sm:$0xff]
        %v231 = vld [vmem:[%s226 + $0x20] sm:$0xff]
        %v232 = vld [vmem:[%s226 + $0x28] sm:$0xff]
        %v233 = vld [vmem:[%s226 + $0x30] sm:$0xff]
        %v234 = vld [vmem:[%s226 + $0x38] sm:$0xff]
        %v235 = vld [vmem:[%s226 + $0x40] sm:$0x3]
        %v236 = vld [vmem:[%s226 + $0x48] sm:$0x3]
        %v237 = vld [vmem:[%s226 + $0x50] sm:$0x3]
        %v238 = vld [vmem:[%s226 + $0x58] sm:$0x3]
        %vm242 = vcmask 1046528
        %v243 = vrot.slane %v211, 1
        %v244 = vrot.slane %v212, 1
        %v245 = vsel %vm242, %v243, %v244
        %v246 = vrot.slane %v213, 1
        %v247 = vsel %vm242, %v244, %v246
        %vm248 = vcmask 146432
        %v249 = vsel %vm248, %v245, 0
        %v251 = vsel %vm248, %v247, 0
        %vm253 = vcmask 1041408
        %v255 = vsel %vm253, %v235, 0
        %v258 = vsel %vm253, %v236, 0
        %v261 = vsel %vm253, %v237, 0
        %v264 = vsel %vm253, %v238, 0
        %266 = vmatprep.subr.mxu0 %v228
        %267 = vmatpush1.msra.mxu0 %v227
        %268 = vmatprep.subr.mxu0 %v232
        %269 = vmatpush1.msra.mxu0 %v231
        %270 = vmatprep.subr.mxu0 %v258
        %271 = vmatpush1.msra.mxu0 %v255
        %272 = vmatprep.subr.mxu0 0.0
        %273 = vmatpush1.msra.mxu0 0.0
        %274 = vmatprep.subr.mxu0 0.0
        %275 = vmatpush1.msra.mxu0 0.0
        %276 = vmatprep.subr.mxu0 0.0
        %277 = vmatpush1.msra.mxu0 0.0
        %278 = vmatprep.subr.mxu0 0.0
        %279 = vmatpush1.msra.mxu0 0.0
        %280 = vmatprep.subr.mxu0 0.0
        %281 = vmatpush1.msra.mxu0 0.0
        %282 = vmatprep.subr.mxu0 0.0
        %283 = vmatpush1.msra.mxu0 0.0
        %284 = vmatprep.subr.mxu0 0.0
        %285 = vmatpush1.msra.mxu0 0.0
        %286 = vmatprep.subr.mxu0 0.0
        %287 = vmatpush1.msra.mxu0 0.0
        %288 = vmatprep.subr.mxu0 0.0
        %289 = vmatpush1.msra.mxu0 0.0
        %290 = vmatprep.subr.mxu0 0.0
        %291 = vmatpush1.msra.mxu0 0.0
        %292 = vmatprep.subr.mxu0 0.0
        %293 = vmatpush1.msra.mxu0 0.0
        %294 = vmatprep.subr.mxu0 0.0
        %295 = vmatpush1.msra.mxu0 0.0
        %296 = vmatprep.subr.mxu0 0.0
        %297 = vmatpush1.msra.mxu0 0.0
        %298 = vmatprep.subr.mxu0 0.0
        %299 = vmatpush1.msra.mxu0 0.0
        %300 = vmatprep.subr.mxu0 0.0
        %301 = vmatpush1.msra.mxu0 0.0
        %302 = vmatprep.subr.mxu0 0.0
        %303 = vmatpush1.msra.mxu0 0.0
        %304 = vmatprep.subr.mxu0 0.0
        %305 = vmatpush1.msra.mxu0 0.0
        %306 = vmatprep.subr.mxu0 0.0
        %307 = vmatpush1.msra.mxu0 0.0
        %308 = vmatprep.subr.mxu0 0.0
        %309 = vmatpush1.msra.mxu0 0.0
        %310 = vmatprep.subr.mxu0 0.0
        %311 = vmatpush1.msra.mxu0 0.0
        %312 = vmatprep.subr.mxu0 0.0
        %313 = vmatpush1.msra.mxu0 0.0
        %314 = vmatprep.subr.mxu0 0.0
        %315 = vmatpush1.msra.mxu0 0.0
        %316 = vmatprep.subr.mxu0 0.0
        %317 = vmatpush1.msra.mxu0 0.0
        %318 = vmatprep.subr.mxu0 0.0
        %319 = vmatpush1.msra.mxu0 0.0
        %320 = vmatprep.subr.mxu0 0.0
        %321 = vmatpush1.msra.mxu0 0.0
        %322 = vmatprep.subr.mxu0 0.0
        %323 = vmatpush1.msra.mxu0 0.0
        %324 = vmatprep.subr.mxu0 0.0
        %325 = vmatpush1.msra.mxu0 0.0
        %326 = vmatprep.subr.mxu0 0.0
        %327 = vmatpush1.msra.mxu0 0.0
        %328 = vmatprep.subr.mxu0 0.0
        %329 = vmatpush1.msra.mxu0 0.0
        %330 = vmatprep.mubr.f32.mxu0 0.0
        %331 = vmatmul.mubr.f32.gmra.mrb[0].mxu0 %v249
        %v332 = vpop.f32.mrb[0].mxu0
        %v333 = vadd.f32 0.0, %v332
        %v334 = vpop.f32.mrb[0].mxu0
        %v335 = vadd.f32 0.0, %v334
        %336 = vmatprep.mubr.f32.mxu0 0.0
        %337 = vmatmul.mubr.f32.gmra.mrb[0].mxu0 %v251
        %v338 = vpop.f32.mrb[0].mxu0
        %v339 = vadd.f32 0.0, %v338
        %v340 = vpop.f32.mrb[0].mxu0
        %v341 = vadd.f32 0.0, %v340
        %342 = vdwg.mxu0
        %343 = vmatprep.subr.mxu0 %v230
        %344 = vmatpush1.msra.mxu0 %v229
        %345 = vmatprep.subr.mxu0 %v234
        %346 = vmatpush1.msra.mxu0 %v233
        %347 = vmatprep.subr.mxu0 %v264
        %348 = vmatpush1.msra.mxu0 %v261
        %349 = vmatprep.subr.mxu0 0.0
        %350 = vmatpush1.msra.mxu0 0.0
        %351 = vmatprep.subr.mxu0 0.0
        %352 = vmatpush1.msra.mxu0 0.0
        %353 = vmatprep.subr.mxu0 0.0
        %354 = vmatpush1.msra.mxu0 0.0
        %355 = vmatprep.subr.mxu0 0.0
        %356 = vmatpush1.msra.mxu0 0.0
        %357 = vmatprep.subr.mxu0 0.0
        %358 = vmatpush1.msra.mxu0 0.0
        %359 = vmatprep.subr.mxu0 0.0
        %360 = vmatpush1.msra.mxu0 0.0
        %361 = vmatprep.subr.mxu0 0.0
        %362 = vmatpush1.msra.mxu0 0.0
        %363 = vmatprep.subr.mxu0 0.0
        %364 = vmatpush1.msra.mxu0 0.0
        %365 = vmatprep.subr.mxu0 0.0
        %366 = vmatpush1.msra.mxu0 0.0
        %367 = vmatprep.subr.mxu0 0.0
        %368 = vmatpush1.msra.mxu0 0.0
        %369 = vmatprep.subr.mxu0 0.0
        %370 = vmatpush1.msra.mxu0 0.0
        %371 = vmatprep.subr.mxu0 0.0
        %372 = vmatpush1.msra.mxu0 0.0
        %373 = vmatprep.subr.mxu0 0.0
        %374 = vmatpush1.msra.mxu0 0.0
        %375 = vmatprep.subr.mxu0 0.0
        %376 = vmatpush1.msra.mxu0 0.0
        %377 = vmatprep.subr.mxu0 0.0
        %378 = vmatpush1.msra.mxu0 0.0
        %379 = vmatprep.subr.mxu0 0.0
        %380 = vmatpush1.msra.mxu0 0.0
        %381 = vmatprep.subr.mxu0 0.0
        %382 = vmatpush1.msra.mxu0 0.0
        %383 = vmatprep.subr.mxu0 0.0
        %384 = vmatpush1.msra.mxu0 0.0
        %385 = vmatprep.subr.mxu0 0.0
        %386 = vmatpush1.msra.mxu0 0.0
        %387 = vmatprep.subr.mxu0 0.0
        %388 = vmatpush1.msra.mxu0 0.0
        %389 = vmatprep.subr.mxu0 0.0
        %390 = vmatpush1.msra.mxu0 0.0
        %391 = vmatprep.subr.mxu0 0.0
        %392 = vmatpush1.msra.mxu0 0.0
        %393 = vmatprep.subr.mxu0 0.0
        %394 = vmatpush1.msra.mxu0 0.0
        %395 = vmatprep.subr.mxu0 0.0
        %396 = vmatpush1.msra.mxu0 0.0
        %397 = vmatprep.subr.mxu0 0.0
        %398 = vmatpush1.msra.mxu0 0.0
        %399 = vmatprep.subr.mxu0 0.0
        %400 = vmatpush1.msra.mxu0 0.0
        %401 = vmatprep.subr.mxu0 0.0
        %402 = vmatpush1.msra.mxu0 0.0
        %403 = vmatprep.subr.mxu0 0.0
        %404 = vmatpush1.msra.mxu0 0.0
        %405 = vmatprep.subr.mxu0 0.0
        %406 = vmatpush1.msra.mxu0 0.0
        %407 = vmatprep.mubr.f32.mxu0 0.0
        %408 = vmatmul.mubr.f32.gmra.mrb[0].mxu0 %v249
        %v409 = vpop.f32.mrb[0].mxu0
        %v410 = vadd.f32 0.0, %v409
        %v411 = vpop.f32.mrb[0].mxu0
        %v412 = vadd.f32 0.0, %v411
        %413 = vmatprep.mubr.f32.mxu0 0.0
        %414 = vmatmul.mubr.f32.gmra.mrb[0].mxu0 %v251
        %v415 = vpop.f32.mrb[0].mxu0
        %v416 = vadd.f32 0.0, %v415
        %v417 = vpop.f32.mrb[0].mxu0
        %v418 = vadd.f32 0.0, %v417
        %419 = vdwg.mxu0
        %v420 = vsel %vm248, %v211, 0
        %v422 = vsel %vm248, %v212, 0
        %v425 = vsel %vm253, %v222, 0
        %v428 = vsel %vm253, %v223, 0
        %v431 = vsel %vm253, %v224, 0
        %v434 = vsel %vm253, %v225, 0
        %436 = vmatprep.subr.mxu0 %v215
        %437 = vmatpush1.msra.mxu0 %v214
        %438 = vmatprep.subr.mxu0 %v219
        %439 = vmatpush1.msra.mxu0 %v218
        %440 = vmatprep.subr.mxu0 %v428
        %441 = vmatpush1.msra.mxu0 %v425
        %442 = vmatprep.subr.mxu0 0.0
        %443 = vmatpush1.msra.mxu0 0.0
        %444 = vmatprep.subr.mxu0 0.0
        %445 = vmatpush1.msra.mxu0 0.0
        %446 = vmatprep.subr.mxu0 0.0
        %447 = vmatpush1.msra.mxu0 0.0
        %448 = vmatprep.subr.mxu0 0.0
        %449 = vmatpush1.msra.mxu0 0.0
        %450 = vmatprep.subr.mxu0 0.0
        %451 = vmatpush1.msra.mxu0 0.0
        %452 = vmatprep.subr.mxu0 0.0
        %453 = vmatpush1.msra.mxu0 0.0
        %454 = vmatprep.subr.mxu0 0.0
        %455 = vmatpush1.msra.mxu0 0.0
        %456 = vmatprep.subr.mxu0 0.0
        %457 = vmatpush1.msra.mxu0 0.0
        %458 = vmatprep.subr.mxu0 0.0
        %459 = vmatpush1.msra.mxu0 0.0
        %460 = vmatprep.subr.mxu0 0.0
        %461 = vmatpush1.msra.mxu0 0.0
        %462 = vmatprep.subr.mxu0 0.0
        %463 = vmatpush1.msra.mxu0 0.0
        %464 = vmatprep.subr.mxu0 0.0
        %465 = vmatpush1.msra.mxu0 0.0
        %466 = vmatprep.subr.mxu0 0.0
        %467 = vmatpush1.msra.mxu0 0.0
        %468 = vmatprep.subr.mxu0 0.0
        %469 = vmatpush1.msra.mxu0 0.0
        %470 = vmatprep.subr.mxu0 0.0
        %471 = vmatpush1.msra.mxu0 0.0
        %472 = vmatprep.subr.mxu0 0.0
        %473 = vmatpush1.msra.mxu0 0.0
        %474 = vmatprep.subr.mxu0 0.0
        %475 = vmatpush1.msra.mxu0 0.0
        %476 = vmatprep.subr.mxu0 0.0
        %477 = vmatpush1.msra.mxu0 0.0
        %478 = vmatprep.subr.mxu0 0.0
        %479 = vmatpush1.msra.mxu0 0.0
        %480 = vmatprep.subr.mxu0 0.0
        %481 = vmatpush1.msra.mxu0 0.0
        %482 = vmatprep.subr.mxu0 0.0
        %483 = vmatpush1.msra.mxu0 0.0
        %484 = vmatprep.subr.mxu0 0.0
        %485 = vmatpush1.msra.mxu0 0.0
        %486 = vmatprep.subr.mxu0 0.0
        %487 = vmatpush1.msra.mxu0 0.0
        %488 = vmatprep.subr.mxu0 0.0
        %489 = vmatpush1.msra.mxu0 0.0
        %490 = vmatprep.subr.mxu0 0.0
        %491 = vmatpush1.msra.mxu0 0.0
        %492 = vmatprep.subr.mxu0 0.0
        %493 = vmatpush1.msra.mxu0 0.0
        %494 = vmatprep.subr.mxu0 0.0
        %495 = vmatpush1.msra.mxu0 0.0
        %496 = vmatprep.subr.mxu0 0.0
        %497 = vmatpush1.msra.mxu0 0.0
        %498 = vmatprep.subr.mxu0 0.0
        %499 = vmatpush1.msra.mxu0 0.0
        %500 = vmatprep.mubr.f32.mxu0 0.0
        %501 = vmatmul.mubr.f32.gmra.mrb[0].mxu0 %v420
        %v502 = vpop.f32.mrb[0].mxu0
        %v503 = vadd.f32 %v333, %v502
        %v504 = vpop.f32.mrb[0].mxu0
        %v505 = vadd.f32 %v335, %v504
        %506 = vmatprep.mubr.f32.mxu0 0.0
        %507 = vmatmul.mubr.f32.gmra.mrb[0].mxu0 %v422
        %v508 = vpop.f32.mrb[0].mxu0
        %v509 = vadd.f32 %v339, %v508
        %v510 = vpop.f32.mrb[0].mxu0
        %v511 = vadd.f32 %v341, %v510
        %512 = vdwg.mxu0
        %513 = vmatprep.subr.mxu0 %v217
        %514 = vmatpush1.msra.mxu0 %v216
        %515 = vmatprep.subr.mxu0 %v221
        %516 = vmatpush1.msra.mxu0 %v220
        %517 = vmatprep.subr.mxu0 %v434
        %518 = vmatpush1.msra.mxu0 %v431
        %519 = vmatprep.subr.mxu0 0.0
        %520 = vmatpush1.msra.mxu0 0.0
        %521 = vmatprep.subr.mxu0 0.0
        %522 = vmatpush1.msra.mxu0 0.0
        %523 = vmatprep.subr.mxu0 0.0
        %524 = vmatpush1.msra.mxu0 0.0
        %525 = vmatprep.subr.mxu0 0.0
        %526 = vmatpush1.msra.mxu0 0.0
        %527 = vmatprep.subr.mxu0 0.0
        %528 = vmatpush1.msra.mxu0 0.0
        %529 = vmatprep.subr.mxu0 0.0
        %530 = vmatpush1.msra.mxu0 0.0
        %531 = vmatprep.subr.mxu0 0.0
        %532 = vmatpush1.msra.mxu0 0.0
        %533 = vmatprep.subr.mxu0 0.0
        %534 = vmatpush1.msra.mxu0 0.0
        %535 = vmatprep.subr.mxu0 0.0
        %536 = vmatpush1.msra.mxu0 0.0
        %537 = vmatprep.subr.mxu0 0.0
        %538 = vmatpush1.msra.mxu0 0.0
        %539 = vmatprep.subr.mxu0 0.0
        %540 = vmatpush1.msra.mxu0 0.0
        %541 = vmatprep.subr.mxu0 0.0
        %542 = vmatpush1.msra.mxu0 0.0
        %543 = vmatprep.subr.mxu0 0.0
        %544 = vmatpush1.msra.mxu0 0.0
        %545 = vmatprep.subr.mxu0 0.0
        %546 = vmatpush1.msra.mxu0 0.0
        %547 = vmatprep.subr.mxu0 0.0
        %548 = vmatpush1.msra.mxu0 0.0
        %549 = vmatprep.subr.mxu0 0.0
        %550 = vmatpush1.msra.mxu0 0.0
        %551 = vmatprep.subr.mxu0 0.0
        %552 = vmatpush1.msra.mxu0 0.0
        %553 = vmatprep.subr.mxu0 0.0
        %554 = vmatpush1.msra.mxu0 0.0
        %555 = vmatprep.subr.mxu0 0.0
        %556 = vmatpush1.msra.mxu0 0.0
        %557 = vmatprep.subr.mxu0 0.0
        %558 = vmatpush1.msra.mxu0 0.0
        %559 = vmatprep.subr.mxu0 0.0
        %560 = vmatpush1.msra.mxu0 0.0
        %561 = vmatprep.subr.mxu0 0.0
        %562 = vmatpush1.msra.mxu0 0.0
        %563 = vmatprep.subr.mxu0 0.0
        %564 = vmatpush1.msra.mxu0 0.0
        %565 = vmatprep.subr.mxu0 0.0
        %566 = vmatpush1.msra.mxu0 0.0
        %567 = vmatprep.subr.mxu0 0.0
        %568 = vmatpush1.msra.mxu0 0.0
        %569 = vmatprep.subr.mxu0 0.0
        %570 = vmatpush1.msra.mxu0 0.0
        %571 = vmatprep.subr.mxu0 0.0
        %572 = vmatpush1.msra.mxu0 0.0
        %573 = vmatprep.subr.mxu0 0.0
        %574 = vmatpush1.msra.mxu0 0.0
        %575 = vmatprep.subr.mxu0 0.0
        %576 = vmatpush1.msra.mxu0 0.0
        %577 = vmatprep.mubr.f32.mxu0 0.0
        %578 = vmatmul.mubr.f32.gmra.mrb[0].mxu0 %v420
        %v579 = vpop.f32.mrb[0].mxu0
        %v580 = vadd.f32 %v410, %v579
        %v581 = vpop.f32.mrb[0].mxu0
        %v582 = vadd.f32 %v412, %v581
        %583 = vmatprep.mubr.f32.mxu0 0.0
        %584 = vmatmul.mubr.f32.gmra.mrb[0].mxu0 %v422
        %v585 = vpop.f32.mrb[0].mxu0
        %v586 = vadd.f32 %v416, %v585
        %v587 = vpop.f32.mrb[0].mxu0
        %v588 = vadd.f32 %v418, %v587
        %589 = vdwg.mxu0
        %s590 = scalar_lea.vmem [#allocation2], 192
        %v591 = vld [vmem:[%s590] sm:$0xff]
        %v592 = vld [vmem:[%s590 + $0x8] sm:$0xff]
        %v593 = vld [vmem:[%s590 + $0x10] sm:$0xff]
        %v594 = vld [vmem:[%s590 + $0x18] sm:$0xff]
        %v595 = vld [vmem:[%s590 + $0x20] sm:$0xff]
        %v596 = vld [vmem:[%s590 + $0x28] sm:$0xff]
        %v597 = vld [vmem:[%s590 + $0x30] sm:$0xff]
        %v598 = vld [vmem:[%s590 + $0x38] sm:$0xff]
        %v599 = vld [vmem:[%s590 + $0x40] sm:$0x3]
        %v600 = vld [vmem:[%s590 + $0x48] sm:$0x3]
        %v601 = vld [vmem:[%s590 + $0x50] sm:$0x3]
        %v602 = vld [vmem:[%s590 + $0x58] sm:$0x3]
        %vm603 = vcmask 1045504
        %v604 = vrot.slane %v211, 2
        %v605 = vrot.slane %v212, 2
        %v606 = vsel %vm603, %v604, %v605
        %v607 = vrot.slane %v213, 2
        %v608 = vsel %vm603, %v605, %v607
        %v609 = vsel %vm248, %v606, 0
        %v611 = vsel %vm248, %v608, 0
        %v614 = vsel %vm253, %v599, 0
        %v617 = vsel %vm253, %v600, 0
        %v620 = vsel %vm253, %v601, 0
        %v623 = vsel %vm253, %v602, 0
        %625 = vmatprep.subr.mxu0 %v592
        %626 = vmatpush1.msra.mxu0 %v591
        %627 = vmatprep.subr.mxu0 %v596
        %628 = vmatpush1.msra.mxu0 %v595
        %629 = vmatprep.subr.mxu0 %v617
        %630 = vmatpush1.msra.mxu0 %v614
        %631 = vmatprep.subr.mxu0 0.0
        %632 = vmatpush1.msra.mxu0 0.0
        %633 = vmatprep.subr.mxu0 0.0
        %634 = vmatpush1.msra.mxu0 0.0
        %635 = vmatprep.subr.mxu0 0.0
        %636 = vmatpush1.msra.mxu0 0.0
        %637 = vmatprep.subr.mxu0 0.0
        %638 = vmatpush1.msra.mxu0 0.0
        %639 = vmatprep.subr.mxu0 0.0
        %640 = vmatpush1.msra.mxu0 0.0
        %641 = vmatprep.subr.mxu0 0.0
        %642 = vmatpush1.msra.mxu0 0.0
        %643 = vmatprep.subr.mxu0 0.0
        %644 = vmatpush1.msra.mxu0 0.0
        %645 = vmatprep.subr.mxu0 0.0
        %646 = vmatpush1.msra.mxu0 0.0
        %647 = vmatprep.subr.mxu0 0.0
        %648 = vmatpush1.msra.mxu0 0.0
        %649 = vmatprep.subr.mxu0 0.0
        %650 = vmatpush1.msra.mxu0 0.0
        %651 = vmatprep.subr.mxu0 0.0
        %652 = vmatpush1.msra.mxu0 0.0
        %653 = vmatprep.subr.mxu0 0.0
        %654 = vmatpush1.msra.mxu0 0.0
        %655 = vmatprep.subr.mxu0 0.0
        %656 = vmatpush1.msra.mxu0 0.0
        %657 = vmatprep.subr.mxu0 0.0
        %658 = vmatpush1.msra.mxu0 0.0
        %659 = vmatprep.subr.mxu0 0.0
        %660 = vmatpush1.msra.mxu0 0.0
        %661 = vmatprep.subr.mxu0 0.0
        %662 = vmatpush1.msra.mxu0 0.0
        %663 = vmatprep.subr.mxu0 0.0
        %664 = vmatpush1.msra.mxu0 0.0
        %665 = vmatprep.subr.mxu0 0.0
        %666 = vmatpush1.msra.mxu0 0.0
        %667 = vmatprep.subr.mxu0 0.0
        %668 = vmatpush1.msra.mxu0 0.0
        %669 = vmatprep.subr.mxu0 0.0
        %670 = vmatpush1.msra.mxu0 0.0
        %671 = vmatprep.subr.mxu0 0.0
        %672 = vmatpush1.msra.mxu0 0.0
        %673 = vmatprep.subr.mxu0 0.0
        %674 = vmatpush1.msra.mxu0 0.0
        %675 = vmatprep.subr.mxu0 0.0
        %676 = vmatpush1.msra.mxu0 0.0
        %677 = vmatprep.subr.mxu0 0.0
        %678 = vmatpush1.msra.mxu0 0.0
        %679 = vmatprep.subr.mxu0 0.0
        %680 = vmatpush1.msra.mxu0 0.0
        %681 = vmatprep.subr.mxu0 0.0
        %682 = vmatpush1.msra.mxu0 0.0
        %683 = vmatprep.subr.mxu0 0.0
        %684 = vmatpush1.msra.mxu0 0.0
        %685 = vmatprep.subr.mxu0 0.0
        %686 = vmatpush1.msra.mxu0 0.0
        %687 = vmatprep.subr.mxu0 0.0
        %688 = vmatpush1.msra.mxu0 0.0
        %689 = vmatprep.mubr.f32.mxu0 0.0
        %690 = vmatmul.mubr.f32.gmra.mrb[0].mxu0 %v609
        %v691 = vpop.f32.mrb[0].mxu0
        %v692 = vadd.f32 0.0, %v691
        %v693 = vpop.f32.mrb[0].mxu0
        %v694 = vadd.f32 0.0, %v693
        %695 = vmatprep.mubr.f32.mxu0 0.0
        %696 = vmatmul.mubr.f32.gmra.mrb[0].mxu0 %v611
        %v697 = vpop.f32.mrb[0].mxu0
        %v698 = vadd.f32 0.0, %v697
        %v699 = vpop.f32.mrb[0].mxu0
        %v700 = vadd.f32 0.0, %v699
        %701 = vdwg.mxu0
        %702 = vmatprep.subr.mxu0 %v594
        %703 = vmatpush1.msra.mxu0 %v593
        %704 = vmatprep.subr.mxu0 %v598
        %705 = vmatpush1.msra.mxu0 %v597
        %706 = vmatprep.subr.mxu0 %v623
        %707 = vmatpush1.msra.mxu0 %v620
        %708 = vmatprep.subr.mxu0 0.0
        %709 = vmatpush1.msra.mxu0 0.0
        %710 = vmatprep.subr.mxu0 0.0
        %711 = vmatpush1.msra.mxu0 0.0
        %712 = vmatprep.subr.mxu0 0.0
        %713 = vmatpush1.msra.mxu0 0.0
        %714 = vmatprep.subr.mxu0 0.0
        %715 = vmatpush1.msra.mxu0 0.0
        %716 = vmatprep.subr.mxu0 0.0
        %717 = vmatpush1.msra.mxu0 0.0
        %718 = vmatprep.subr.mxu0 0.0
        %719 = vmatpush1.msra.mxu0 0.0
        %720 = vmatprep.subr.mxu0 0.0
        %721 = vmatpush1.msra.mxu0 0.0
        %722 = vmatprep.subr.mxu0 0.0
        %723 = vmatpush1.msra.mxu0 0.0
        %724 = vmatprep.subr.mxu0 0.0
        %725 = vmatpush1.msra.mxu0 0.0
        %726 = vmatprep.subr.mxu0 0.0
        %727 = vmatpush1.msra.mxu0 0.0
        %728 = vmatprep.subr.mxu0 0.0
        %729 = vmatpush1.msra.mxu0 0.0
        %730 = vmatprep.subr.mxu0 0.0
        %731 = vmatpush1.msra.mxu0 0.0
        %732 = vmatprep.subr.mxu0 0.0
        %733 = vmatpush1.msra.mxu0 0.0
        %734 = vmatprep.subr.mxu0 0.0
        %735 = vmatpush1.msra.mxu0 0.0
        %736 = vmatprep.subr.mxu0 0.0
        %737 = vmatpush1.msra.mxu0 0.0
        %738 = vmatprep.subr.mxu0 0.0
        %739 = vmatpush1.msra.mxu0 0.0
        %740 = vmatprep.subr.mxu0 0.0
        %741 = vmatpush1.msra.mxu0 0.0
        %742 = vmatprep.subr.mxu0 0.0
        %743 = vmatpush1.msra.mxu0 0.0
        %744 = vmatprep.subr.mxu0 0.0
        %745 = vmatpush1.msra.mxu0 0.0
        %746 = vmatprep.subr.mxu0 0.0
        %747 = vmatpush1.msra.mxu0 0.0
        %748 = vmatprep.subr.mxu0 0.0
        %749 = vmatpush1.msra.mxu0 0.0
        %750 = vmatprep.subr.mxu0 0.0
        %751 = vmatpush1.msra.mxu0 0.0
        %752 = vmatprep.subr.mxu0 0.0
        %753 = vmatpush1.msra.mxu0 0.0
        %754 = vmatprep.subr.mxu0 0.0
        %755 = vmatpush1.msra.mxu0 0.0
        %756 = vmatprep.subr.mxu0 0.0
        %757 = vmatpush1.msra.mxu0 0.0
        %758 = vmatprep.subr.mxu0 0.0
        %759 = vmatpush1.msra.mxu0 0.0
        %760 = vmatprep.subr.mxu0 0.0
        %761 = vmatpush1.msra.mxu0 0.0
        %762 = vmatprep.subr.mxu0 0.0
        %763 = vmatpush1.msra.mxu0 0.0
        %764 = vmatprep.subr.mxu0 0.0
        %765 = vmatpush1.msra.mxu0 0.0
        %766 = vmatprep.mubr.f32.mxu0 0.0
        %767 = vmatmul.mubr.f32.gmra.mrb[0].mxu0 %v609
        %v768 = vpop.f32.mrb[0].mxu0
        %v769 = vadd.f32 0.0, %v768
        %v770 = vpop.f32.mrb[0].mxu0
        %v771 = vadd.f32 0.0, %v770
        %772 = vmatprep.mubr.f32.mxu0 0.0
        %773 = vmatmul.mubr.f32.gmra.mrb[0].mxu0 %v611
        %v774 = vpop.f32.mrb[0].mxu0
        %v775 = vadd.f32 0.0, %v774
        %v776 = vpop.f32.mrb[0].mxu0
        %v777 = vadd.f32 0.0, %v776
        %778 = vdwg.mxu0
        %v779 = vadd.f32 %v503, %v692
        %v780 = vadd.f32 %v505, %v694
        %v781 = vadd.f32 %v580, %v769
        %v782 = vadd.f32 %v582, %v771
        %v783 = vadd.f32 %v509, %v698
        %v784 = vadd.f32 %v511, %v700
        %v785 = vadd.f32 %v586, %v775
        %v786 = vadd.f32 %v588, %v777
        %v787 = vmax.f32 %v779, %v781
        %v788 = vmax.f32 %v780, %v782
        %v789 = vmax.f32 %v783, %v785
        %v790 = vmax.f32 %v784, %v786
        %v795 = vcombine.low %v787, %v788
        %v796 = vcombine.high %v787, %v788
        %v798 = vunpack.c.l.s4 1983009808
        %v799 = vunpack.c.0.s8 %v798
        %v800 = vlaneseq
        %v801 = vshrl.u32 %v800, 7
        %v802 = vsub.s32 %v799, %v801
        %v803 = vrot.slane %v795, %v802
        %v805 = vunpack.c.l.s4 1983009808
        %v806 = vunpack.c.0.s8 %v805
        %v807 = vlaneseq
        %v808 = vshrl.u32 %v807, 7
        %v809 = vsub.s32 %v806, %v808
        %v810 = vrot.slane %v796, %v809
        %v811 = vcombine.high %v803, %v803
        %v812 = vcombine.high %v810, %v810
        %v813 = vcombine.low %v789, %v790
        %v814 = vcombine.high %v789, %v790
        %v816 = vunpack.c.l.s4 1983009808
        %v817 = vunpack.c.0.s8 %v816
        %v818 = vlaneseq
        %v819 = vshrl.u32 %v818, 7
        %v820 = vsub.s32 %v817, %v819
        %v821 = vrot.slane %v813, %v820
        %v823 = vunpack.c.l.s4 1983009808
        %v824 = vunpack.c.0.s8 %v823
        %v825 = vlaneseq
        %v826 = vshrl.u32 %v825, 7
        %v827 = vsub.s32 %v824, %v826
        %v828 = vrot.slane %v814, %v827
        %v829 = vcombine.high %v821, %v821
        %v830 = vcombine.high %v828, %v828
        %v839 = vrot.slane %v803, 7
        %v840 = vrot.slane %v839, 2
        %v841 = vrot.slane %v811, 7
        %v842 = vrot.slane %v841, 2
        %v843 = vrot.slane %v810, 7
        %v844 = vrot.slane %v843, 2
        %v845 = vrot.slane %v812, 7
        %v846 = vrot.slane %v845, 2
        %v847 = vrot.slane %v821, 7
        %v848 = vrot.slane %v847, 2
        %v849 = vrot.slane %v829, 7
        %v850 = vrot.slane %v849, 2
        %v851 = vrot.slane %v828, 7
        %v852 = vrot.slane %v851, 2
        %v853 = vrot.slane %v830, 7
        %v854 = vrot.slane %v853, 2
        %v863 = vmax.f32 %v803, %v840
        %v864 = vmax.f32 %v811, %v842
        %v865 = vmax.f32 %v810, %v844
        %v866 = vmax.f32 %v812, %v846
        %v867 = vmax.f32 %v821, %v848
        %v868 = vmax.f32 %v829, %v850
        %v869 = vmax.f32 %v828, %v852
        %v870 = vmax.f32 %v830, %v854
        %v871 = vld [vmem:[%s2] sm:$0x3]
        %v873 = vlaneseq
        %v874 = vshrl.u32 %v873, 7
        %v875 = vsub.s32 0, %v874
        %v876 = vrot.slane %v871, %v875
        %v877 = vlaneseq
        %v878 = vshrl.u32 %v877, 7
        %v879 = vsub.s32 1, %v878
        %v880 = vrot.slane %v871, %v879
        %v881 = vcombine.low %v876, %v880
        %v882 = vcombine.high %v876, %v880
        %v884 = vunpack.c.l.s4 1983009808
        %v885 = vunpack.c.0.s8 %v884
        %v886 = vlaneseq
        %v887 = vshrl.u32 %v886, 7
        %v888 = vsub.s32 %v885, %v887
        %v889 = vrot.slane %v881, %v888
        %v891 = vunpack.c.l.s4 1983009808
        %v892 = vunpack.c.0.s8 %v891
        %v893 = vlaneseq
        %v894 = vshrl.u32 %v893, 7
        %v895 = vsub.s32 %v892, %v894
        %v896 = vrot.slane %v882, %v895
        %v897 = vcombine.high %v889, %v889
        %v898 = vcombine.high %v896, %v896
        %v899 = vrot.slane %v889, 1
        %v900 = vrot.slane %v897, 1
        %v901 = vrot.slane %v896, 1
        %v902 = vrot.slane %v898, 1
        %v911 = vmul.f32 %v863, %v889
        %v912 = vmul.f32 %v864, %v899
        %v913 = vmul.f32 %v865, %v897
        %v914 = vmul.f32 %v866, %v900
        %v915 = vmul.f32 %v867, %v896
        %v916 = vmul.f32 %v868, %v901
        %v917 = vmul.f32 %v869, %v898
        %v918 = vmul.f32 %v870, %v902
        %v919 = vld [vmem:[%s3] sm:$0x3]
        %v921 = vlaneseq
        %v922 = vshrl.u32 %v921, 7
        %v923 = vsub.s32 0, %v922
        %v924 = vrot.slane %v919, %v923
        %v925 = vlaneseq
        %v926 = vshrl.u32 %v925, 7
        %v927 = vsub.s32 1, %v926
        %v928 = vrot.slane %v919, %v927
        %v929 = vcombine.low %v924, %v928
        %v930 = vcombine.high %v924, %v928
        %v932 = vunpack.c.l.s4 1983009808
        %v933 = vunpack.c.0.s8 %v932
        %v934 = vlaneseq
        %v935 = vshrl.u32 %v934, 7
        %v936 = vsub.s32 %v933, %v935
        %v937 = vrot.slane %v929, %v936
        %v939 = vunpack.c.l.s4 1983009808
        %v940 = vunpack.c.0.s8 %v939
        %v941 = vlaneseq
        %v942 = vshrl.u32 %v941, 7
        %v943 = vsub.s32 %v940, %v942
        %v944 = vrot.slane %v930, %v943
        %v945 = vcombine.high %v937, %v937
        %v946 = vcombine.high %v944, %v944
        %v947 = vrot.slane %v937, 1
        %v948 = vrot.slane %v945, 1
        %v949 = vrot.slane %v944, 1
        %v950 = vrot.slane %v946, 1
        %v959 = vadd.f32 %v911, %v937
        %v960 = vadd.f32 %v912, %v947
        %v961 = vadd.f32 %v913, %v945
        %v962 = vadd.f32 %v914, %v948
        %v963 = vadd.f32 %v915, %v944
        %v964 = vadd.f32 %v916, %v949
        %v965 = vadd.f32 %v917, %v946
        %v966 = vadd.f32 %v918, %v950
        %v967 = vmax.f32 %v959, 0.0
        %v968 = vmax.f32 %v960, 0.0
        %v969 = vmax.f32 %v961, 0.0
        %v970 = vmax.f32 %v962, 0.0
        %v971 = vmax.f32 %v963, 0.0
        %v972 = vmax.f32 %v964, 0.0
        %v973 = vmax.f32 %v965, 0.0
        %v974 = vmax.f32 %v966, 0.0
        %v983 = vlaneseq
        %v984 = vshrl.u32 %v983, 7
        %v985 = vsub.s32 0, %v984
        %v986 = vrot.slane %v967, %v985
        %v987 = vlaneseq
        %v988 = vshrl.u32 %v987, 7
        %v989 = vsub.s32 2, %v988
        %v990 = vrot.slane %v967, %v989
        %v991 = vlaneseq
        %v992 = vshrl.u32 %v991, 7
        %v993 = vsub.s32 0, %v992
        %v994 = vrot.slane %v968, %v993
        %v995 = vlaneseq
        %v996 = vshrl.u32 %v995, 7
        %v997 = vsub.s32 2, %v996
        %v998 = vrot.slane %v968, %v997
        %v999 = vlaneseq
        %v1000 = vshrl.u32 %v999, 7
        %v1001 = vsub.s32 0, %v1000
        %v1002 = vrot.slane %v969, %v1001
        %v1003 = vlaneseq
        %v1004 = vshrl.u32 %v1003, 7
        %v1005 = vsub.s32 2, %v1004
        %v1006 = vrot.slane %v969, %v1005
        %v1007 = vlaneseq
        %v1008 = vshrl.u32 %v1007, 7
        %v1009 = vsub.s32 0, %v1008
        %v1010 = vrot.slane %v970, %v1009
        %v1011 = vlaneseq
        %v1012 = vshrl.u32 %v1011, 7
        %v1013 = vsub.s32 2, %v1012
        %v1014 = vrot.slane %v970, %v1013
        %v1015 = vlaneseq
        %v1016 = vshrl.u32 %v1015, 7
        %v1017 = vsub.s32 0, %v1016
        %v1018 = vrot.slane %v971, %v1017
        %v1019 = vlaneseq
        %v1020 = vshrl.u32 %v1019, 7
        %v1021 = vsub.s32 2, %v1020
        %v1022 = vrot.slane %v971, %v1021
        %v1023 = vlaneseq
        %v1024 = vshrl.u32 %v1023, 7
        %v1025 = vsub.s32 0, %v1024
        %v1026 = vrot.slane %v972, %v1025
        %v1027 = vlaneseq
        %v1028 = vshrl.u32 %v1027, 7
        %v1029 = vsub.s32 2, %v1028
        %v1030 = vrot.slane %v972, %v1029
        %v1031 = vlaneseq
        %v1032 = vshrl.u32 %v1031, 7
        %v1033 = vsub.s32 0, %v1032
        %v1034 = vrot.slane %v973, %v1033
        %v1035 = vlaneseq
        %v1036 = vshrl.u32 %v1035, 7
        %v1037 = vsub.s32 2, %v1036
        %v1038 = vrot.slane %v973, %v1037
        %v1039 = vlaneseq
        %v1040 = vshrl.u32 %v1039, 7
        %v1041 = vsub.s32 0, %v1040
        %v1042 = vrot.slane %v974, %v1041
        %v1043 = vlaneseq
        %v1044 = vshrl.u32 %v1043, 7
        %v1045 = vsub.s32 2, %v1044
        %v1046 = vrot.slane %v974, %v1045
        %vm1047 = vcmask 1041409
        %v1048 = vsel %vm1047, %v994, %v986
        %vm1049 = vcmask 1042434
        %v1050 = vsel %vm1049, %v1002, %v1048
        %vm1051 = vcmask 1043459
        %v1052 = vsel %vm1051, %v1010, %v1050
        %vm1053 = vcmask 1044484
        %v1054 = vsel %vm1053, %v1018, %v1052
        %vm1055 = vcmask 1045509
        %v1056 = vsel %vm1055, %v1026, %v1054
        %vm1057 = vcmask 1046534
        %v1058 = vsel %vm1057, %v1034, %v1056
        %vm1059 = vcmask 1047559
        %v1060 = vsel %vm1059, %v1042, %v1058
        %v1061 = vsel %vm1047, %v998, %v990
        %v1062 = vsel %vm1049, %v1006, %v1061
        %v1063 = vsel %vm1051, %v1014, %v1062
        %v1064 = vsel %vm1053, %v1022, %v1063
        %v1065 = vsel %vm1055, %v1030, %v1064
        %v1066 = vsel %vm1057, %v1038, %v1065
        %v1067 = vsel %vm1059, %v1046, %v1066
        %1070 = vst [vmem:[%s205] sm:$0xff] %v1060
        %1071 = vst [vmem:[%s205 + $0x8] sm:$0xff] %v1067
        %s1072 = sand.u32 %s116, 1
        %s1073 = scalar_lea.sflag [#allocation4], %s1072
        %s1074 = sand.u32 %s116, 1
        %s1075 = smul.addr %s1074, 16
        %s1076 = scalar_lea.vmem [#allocation5], %s1075
        // Predicated region
        $region41: #{tpu_custom_call.1} parent=35 // pred_check
          %p1077 = pneg %p126
        $region42: #{tpu_custom_call.1} parent=35 // pred_check_branch
          %1079 = sbr.rel (%p1077) target = $region44
        $region43: #{tpu_custom_call.1} parent=35 // pred_region
          %s1081 = ssub.s32 256, 256
          %1082 = vsyncadd %s1073, %s1081
          %s1083 = smul.addr %s19, 2
          %s1084 = smul.addr %s1083, 128
          %s1085 = scalar_lea.hbm %s4, %s1084
          %s1087 = sshll.u32 %s1076, 4
          %s1088 = int_to_ptr.vmem [resolvable:$true] %s1087
          %1090 = dma.vmem_to_hbm [thread:$0]  %s1088, 256, %s1085, %s1073
        $region44: #{tpu_custom_call.1} parent=35 // pred_fallthru
          _
      $region36: #{tpu_custom_call.1} parent=5 // pred_fallthru
        _
      %p1091 = scmp.le.s32.totalorder 2, %s14
      // Predicated region
      $region45: #{tpu_custom_call.1} parent=5 // pred_check
        %p1092 = pneg %p1091
      $region46: #{tpu_custom_call.1} parent=5 // pred_check_branch
        %1094 = sbr.rel (%p1092) target = $region48
      $region47: #{tpu_custom_call.1} parent=5 // pred_region
        %s1095 = ssub.s32 %s14, 2
        // Predicated region
        $region49: #{tpu_custom_call.1} parent=47 // pred_check
          %p1096 = pneg %p132
        $region50: #{tpu_custom_call.1} parent=47 // pred_check_branch
          %1098 = sbr.rel (%p1096) target = $region52
        $region51: #{tpu_custom_call.1} parent=47 // pred_region
          %s1099 = sand.u32 %s117, 1
          %s1100 = scalar_lea.sflag [#allocation4], %s1099
          %s1101 = sand.u32 %s117, 1
          %s1102 = smul.addr %s1101, 16
          %s1103 = scalar_lea.vmem [#allocation5], %s1102
          %1104 = dma.done %s1100, 256
        $region52: #{tpu_custom_call.1} parent=47 // pred_fallthru
          _
      $region48: #{tpu_custom_call.1} parent=5 // pred_fallthru
        _
    $region6: #{tpu_custom_call.1} parent=1 // loop_footer
      %s18 = sadd.s32 1, %s14
    $region7: #{tpu_custom_call.1} parent=1 // loop_footer_branch
      %13 = sbr.rel target = $region3
    $region8: #{tpu_custom_call.1} parent=1 // loop_exit
      _
    %1105 = vsyncpa [#allocation3], 1
    %s1106 = scalar_lea.sflag [#allocation3], 1
    %1107 = vsyncpa %s1106, 1
    %1108 = vsyncpa [#allocation4], 1
    %s1109 = scalar_lea.sflag [#allocation4], 1
    %1110 = vsyncpa %s1109, 1

</llo_original>
